<compile_context>
chip_gen: v7x
topology: tpu7x:2x2x1
jax: 0.10.0
libtpu: 0.0.40
codegen_flags: <defaults>
</compile_context>

<pallas_src>
import math

import jax
import jax.numpy as jnp
from jax.experimental import pallas as pl
from jax.experimental.pallas import tpu as pltpu

LEAKY_SLOPE = 0.2        # PyG GATConv default negative_slope
LANE = 128               # TPU lane width; every feature dim is padded to this
NEG_BIG = -1e30          # finite f32 mask sentinel (exp underflows to exactly 0)


def gat_mlp_kernel(adst_ref, asrc_ref, adj_ref, h_ref, wpack_ref, bpack_ref,
                   o_ref, m_sc, l_sc, acc_sc):
    """Grid = (q-tile, k-tile).  Online-softmax attention over source tiles,
    then the MLP head on the last k-tile.

    adst_ref : [tq, 8]    col 0 = alpha_dst = (xW)a_dst for the target tile
    asrc_ref : [8, tk]    row 0 = alpha_src = (xW)a_src for the source tile
    adj_ref  : [tq, tk]   int8 edge mask (j -> i, incl. self loops)
    h_ref    : [tk, 128]  bf16 x @ W_gat for the source tile (zero padded lanes)
    wpack_ref: [2,128,128] bf16: 0=W_mlp1, 1=W_mlp2 (zero padded)
    bpack_ref: [8, 128]   f32: row 0 gat bias, row 1 mlp1 bias, row 2 mlp2 bias
    """
    ki = pl.program_id(1)

    @pl.when(ki == 0)
    def _():
        m_sc[...] = jnp.full_like(m_sc, NEG_BIG)
        l_sc[...] = jnp.zeros_like(l_sc)
        acc_sc[...] = jnp.zeros_like(acc_sc)

    # ---- scores for this (target tile, source tile) block ----
    e = adst_ref[:, 0:1] + asrc_ref[0:1, :]                         # [tq, tk]
    e = jnp.where(e > 0, e, LEAKY_SLOPE * e)                        # LeakyReLU
    e = jnp.where(adj_ref[...] != 0, e, NEG_BIG)                    # mask non-edges

    # ---- online softmax update (unnormalised numerator in acc_sc) ----
    m_prev = m_sc[...]
    m_new = jnp.maximum(m_prev, jnp.max(e, axis=-1, keepdims=True))  # [tq, 1]
    corr = jnp.exp(m_prev - m_new)       # == 0 exactly if previous tiles were all-masked
    p = jnp.exp(e - m_new)               # masked entries underflow to exactly 0
    l_sc[...] = corr * l_sc[...] + jnp.sum(p, axis=-1, keepdims=True)
    acc_sc[...] = corr * acc_sc[...] + jnp.dot(
        p.astype(jnp.bfloat16), h_ref[...], preferred_element_type=jnp.float32)
    m_sc[...] = m_new

    # ---- finalize: normalise, ELU, MLP head (Linear -> ReLU -> Linear) ----
    @pl.when(ki == pl.num_programs(1) - 1)
    def _():
        bias = bpack_ref[...]
        b_gat, b1, b2 = bias[0:1, :], bias[1:2, :], bias[2:3, :]
        inv_l = pl.reciprocal(l_sc[...], approx=True)               # EUP slot
        gat = acc_sc[...] * inv_l + b_gat                           # normalise AFTER the matmul
        gat = jnp.where(gat > 0, gat, jnp.exp(jnp.minimum(gat, 0.0)) - 1.0)   # ELU, overflow-safe
        h1 = jnp.maximum(
            jnp.dot(gat.astype(jnp.bfloat16), wpack_ref[0],
                    preferred_element_type=jnp.float32) + b1, 0.0)
        out = jnp.dot(h1.astype(jnp.bfloat16), wpack_ref[1],
                      preferred_element_type=jnp.float32) + b2
        o_ref[...] = out.astype(o_ref.dtype)                        # lane-dense 128-wide store


def _round_up(v, m):
    return ((v + m - 1) // m) * m


def _pad2(a, rows, cols, dtype=None):
    dtype = a.dtype if dtype is None else dtype
    out = jnp.zeros((rows, cols), dtype)
    return out.at[: a.shape[0], : a.shape[1]].set(a.astype(dtype))


def _vmem_limit_bytes(tq, tk):
    f32, bf16 = 4, 2
    per_step = (
        2 * (tq * 8) * f32            # alpha_dst double buffer
        + 2 * (8 * tk) * f32          # alpha_src double buffer
        + 2 * (tq * tk) * 1           # adjacency tile (int8)
        + 2 * (tk * LANE) * bf16      # h tile (bf16)
        + 2 * (2 * LANE * LANE) * bf16
        + 2 * (8 * LANE) * f32
        + 2 * (tq * LANE) * f32       # output tile
        + (tq * LANE + 2 * tq) * f32  # scratch acc/m/l
        + 8 * (tq * tk) * f32         # elementwise temporaries headroom
    )
    # Generous margin, but capped well below v7x's 64 MiB physical VMEM.
    return int(min(max(4 * per_step, 32 << 20), 48 << 20))


def gat_mlp_forward(x, edge_index, params, *, tq=256, tk=512):
    """GAT_MLP.forward: GATConv (1 head, self-loops, ELU) -> Linear -> ReLU -> Linear."""
    w, a_src, a_dst, b_gat, w1, b1, w2, b2 = params
    n, f_in = x.shape
    h_dim, m_dim, o_dim = w.shape[1], w1.shape[1], w2.shape[1]
    assert max(f_in, h_dim, m_dim, o_dim) <= LANE, "padding strategy assumes feature dims <= 128"

    # Clamp tiles for small graphs: tq multiple of 32 (int8 adj sublane tiling),
    # tk multiple of 128 (adjacency lane dim).
    tq = _round_up(min(tq, _round_up(n, 32)), 32)
    tk = _round_up(min(tk, _round_up(n, 128)), 128)
    n_pad = _round_up(n, math.lcm(tq, tk))

    # ---- hoisted, grid-invariant projections (tiny XLA matmuls, run once) ----
    x32 = x.astype(jnp.float32)
    h = x32 @ w.astype(jnp.float32)                    # [n, H]
    alpha_src = h @ a_src.astype(jnp.float32)          # [n, 1]
    alpha_dst = h @ a_dst.astype(jnp.float32)          # [n, 1]

    h_pad = _pad2(h, n_pad, LANE, jnp.bfloat16)        # bf16 MXU input, half the HBM/VMEM bytes
    adst = _pad2(alpha_dst, n_pad, 8, jnp.float32)     # q side, column 0
    asrc = _pad2(alpha_src.T, 8, n_pad, jnp.float32)   # k side, lane-major row 0

    # Dense adjacency mask (int8): adj[i, j] = 1 iff edge j -> i, plus self loops (PyG default).
    src, dst = edge_index[0], edge_index[1]
    adj = jnp.zeros((n_pad, n_pad), jnp.int8)
    adj = adj.at[dst, src].set(1)
    adj = adj.at[jnp.arange(n), jnp.arange(n)].set(1)

    # Packed MLP weights [2, 128, 128] bf16 and biases [8, 128] f32.
    wpack = jnp.stack([_pad2(w1, LANE, LANE, jnp.bfloat16),
                       _pad2(w2, LANE, LANE, jnp.bfloat16)], axis=0)
    bpack = jnp.zeros((8, LANE), jnp.float32)
    bpack = bpack.at[0, :h_dim].set(b_gat.reshape(-1))
    bpack = bpack.at[1, :m_dim].set(b1.reshape(-1))
    bpack = bpack.at[2, :o_dim].set(b2.reshape(-1))

    out_pad = pl.pallas_call(
        gat_mlp_kernel,
        out_shape=jax.ShapeDtypeStruct((n_pad, LANE), jnp.float32),
        grid_spec=pltpu.PrefetchScalarGridSpec(
            num_scalar_prefetch=0,
            grid=(n_pad // tq, n_pad // tk),
            in_specs=[
                pl.BlockSpec((tq, 8), lambda qi, ki: (qi, 0)),          # alpha_dst (q tile)
                pl.BlockSpec((8, tk), lambda qi, ki: (0, ki)),          # alpha_src (k tile)
                pl.BlockSpec((tq, tk), lambda qi, ki: (qi, ki)),        # adjacency tile (int8)
                pl.BlockSpec((tk, LANE), lambda qi, ki: (ki, 0)),       # h = x @ W_gat (bf16)
                pl.BlockSpec((2, LANE, LANE), lambda qi, ki: (0, 0, 0)),  # MLP weights (resident)
                pl.BlockSpec((8, LANE), lambda qi, ki: (0, 0)),         # biases (resident)
            ],
            out_specs=pl.BlockSpec((tq, LANE), lambda qi, ki: (qi, 0)),
            scratch_shapes=[
                pltpu.VMEM((tq, 1), jnp.float32),      # running max m
                pltpu.VMEM((tq, 1), jnp.float32),      # running sum l
                pltpu.VMEM((tq, LANE), jnp.float32),   # running numerator acc
            ],
        ),
        compiler_params=pltpu.CompilerParams(
            dimension_semantics=("parallel", "arbitrary"),   # q-tiles shard across TCs (v7x)
            vmem_limit_bytes=_vmem_limit_bytes(tq, tk),
        ),
    )(adst, asrc, adj, h_pad, wpack, bpack)
    return out_pad[:n, :o_dim]


def reference_forward(x, edge_index, params):
    """Pure-JAX f32 reference for correctness checking."""
    w, a_src, a_dst, b_gat, w1, b1, w2, b2 = params
    n = x.shape[0]
    adj = jnp.zeros((n, n), jnp.float32)
    adj = adj.at[edge_index[1], edge_index[0]].set(1.0)
    adj = adj.at[jnp.arange(n), jnp.arange(n)].set(1.0)
    h = x @ w
    e = (h @ a_dst) + (h @ a_src).T
    e = jnp.where(e > 0, e, LEAKY_SLOPE * e)
    mask = adj > 0
    e = jnp.where(mask, e, -1e30)
    e = e - jnp.max(e, axis=-1, keepdims=True)
    p = jnp.where(mask, jnp.exp(e), 0.0)
    attn = p / jnp.sum(p, axis=-1, keepdims=True)
    gat = attn @ h + b_gat
    gat = jnp.where(gat > 0, gat, jnp.exp(gat) - 1.0)
    h1 = jnp.maximum(gat @ w1 + b1, 0.0)
    return h1 @ w2 + b2


if __name__ == "__main__":
    # Small deterministic shapes: N=16 nodes, F_in=8, GAT hidden H=32,
    # MLP hidden M=32, output (logit) dim O=16, E=40 edges.
    N, F_IN, H, M, O, E = 16, 8, 32, 32, 16, 40

    key = jax.random.PRNGKey(0)
    kx, ke, kw, ka1, ka2, kb0, kw1, kb1, kw2, kb2 = jax.random.split(key, 10)

    x = jax.random.normal(kx, (N, F_IN), jnp.float32)
    edge_index = jax.random.randint(ke, (2, E), 0, N, dtype=jnp.int32)

    # GATConv params (single head): W [F_in, H], att_src/att_dst [H, 1], bias [1, H]
    w = jax.random.normal(kw, (F_IN, H), jnp.float32) * 0.3
    a_src = jax.random.normal(ka1, (H, 1), jnp.float32) * 0.3
    a_dst = jax.random.normal(ka2, (H, 1), jnp.float32) * 0.3
    b_gat = jax.random.normal(kb0, (1, H), jnp.float32) * 0.1
    # MLP params: Linear(H, M) + ReLU + Linear(M, O)
    w1 = jax.random.normal(kw1, (H, M), jnp.float32) * 0.2
    b1 = jax.random.normal(kb1, (1, M), jnp.float32) * 0.1
    w2 = jax.random.normal(kw2, (M, O), jnp.float32) * 0.2
    b2 = jax.random.normal(kb2, (1, O), jnp.float32) * 0.1

    params = (w, a_src, a_dst, b_gat, w1, b1, w2, b2)

    out = gat_mlp_forward(x, edge_index, params)
    out = jax.block_until_ready(out)

    ref = reference_forward(x, edge_index, params)
    assert out.shape == (N, O), out.shape
    # Tolerance accounts for bf16 MXU inputs (p, h, MLP activations/weights) and
    # the approx reciprocal in the softmax normalization; accumulation stays f32.
    assert jnp.allclose(out, ref, atol=3e-2, rtol=3e-2), "mismatch vs JAX reference"

    # TODO(synk): LinkPredictor.decode_all's `(prob_adj > 0).nonzero()` has a
    # data-dependent output shape (no static-shape Pallas equivalent) and is not
    # part of forward(); omitted.
    print("KERNEL_OK")
</pallas_src>

<mosaic_0001>
module attributes {stable_mosaic.version = 11 : i64} {
  func.func @gat_mlp_kernel(%arg0: i32, %arg1: i32, %arg2: memref<32x8xf32, #tpu.memory_space<vmem>>, %arg3: memref<8x128xf32, #tpu.memory_space<vmem>>, %arg4: memref<32x128xi8, #tpu.memory_space<vmem>>, %arg5: memref<128x128xbf16, #tpu.memory_space<vmem>>, %arg6: memref<2x128x128xbf16, #tpu.memory_space<vmem>>, %arg7: memref<8x128xf32, #tpu.memory_space<vmem>>, %arg8: memref<32x128xf32, #tpu.memory_space<vmem>>, %arg9: memref<32x1xf32, #tpu.memory_space<vmem>>, %arg10: memref<32x1xf32, #tpu.memory_space<vmem>>, %arg11: memref<32x128xf32, #tpu.memory_space<vmem>>) attributes {dimension_semantics = [#tpu.dimension_semantics<parallel>, #tpu.dimension_semantics<arbitrary>], iteration_bounds = array<i64: 4, 1>, scalar_prefetch = 0 : i64, scratch_operands = 3 : i64, tpu.core_type = #tpu.core_type<tc>, window_params = [{transform_indices = @transform_0, window_bounds = array<i64: 32, 8>}, {transform_indices = @transform_1, window_bounds = array<i64: 8, 128>}, {transform_indices = @transform_2, window_bounds = array<i64: 32, 128>}, {transform_indices = @transform_3, window_bounds = array<i64: 128, 128>}, {pipeline_mode = #tpu.pipeline_mode<synchronous>, transform_indices = @transform_4, window_bounds = array<i64: 2, 128, 128>}, {pipeline_mode = #tpu.pipeline_mode<synchronous>, transform_indices = @transform_5, window_bounds = array<i64: 8, 128>}, {transform_indices = @transform_6, window_bounds = array<i64: 32, 128>}]} {
    %c0_i32 = arith.constant 0 : i32
    %0 = arith.cmpi eq, %arg1, %c0_i32 : i32
    %1 = arith.extui %0 : i1 to i32
    %c0_i32_0 = arith.constant 0 : i32
    %2 = arith.cmpi ne, %1, %c0_i32_0 : i32
    scf.if %2 {
      %cst_27 = arith.constant -1.000000e+30 : f32
      %45 = vector.broadcast %cst_27 : f32 to vector<32x1xf32>
      %c0_28 = arith.constant 0 : index
      %c0_29 = arith.constant 0 : index
      %46 = vector.load %arg9[%c0_28, %c0_29] : memref<32x1xf32, #tpu.memory_space<vmem>>, vector<32x1xf32>
      tpu.vector_store %arg9[%c0_28, %c0_29], %45 {strides = array<i32>} : memref<32x1xf32, #tpu.memory_space<vmem>>, vector<32x1xf32>,
      %cst_30 = arith.constant 0.000000e+00 : f32
      %47 = vector.broadcast %cst_30 : f32 to vector<32x1xf32>
      %c0_31 = arith.constant 0 : index
      %c0_32 = arith.constant 0 : index
      %48 = vector.load %arg10[%c0_31, %c0_32] : memref<32x1xf32, #tpu.memory_space<vmem>>, vector<32x1xf32>
      tpu.vector_store %arg10[%c0_31, %c0_32], %47 {strides = array<i32>} : memref<32x1xf32, #tpu.memory_space<vmem>>, vector<32x1xf32>,
      %cst_33 = arith.constant 0.000000e+00 : f32
      %49 = vector.broadcast %cst_33 : f32 to vector<32x128xf32>
      %c0_34 = arith.constant 0 : index
      %c0_35 = arith.constant 0 : index
      %50 = vector.load %arg11[%c0_34, %c0_35] : memref<32x128xf32, #tpu.memory_space<vmem>>, vector<32x128xf32>
      tpu.vector_store %arg11[%c0_34, %c0_35], %49 {strides = array<i32>} : memref<32x128xf32, #tpu.memory_space<vmem>>, vector<32x128xf32>,
    } else {
    }
    %c0 = arith.constant 0 : index
    %c0_1 = arith.constant 0 : index
    %3 = vector.load %arg2[%c0, %c0_1] : memref<32x8xf32, #tpu.memory_space<vmem>>, vector<32x1xf32>
    %c0_2 = arith.constant 0 : index
    %c0_3 = arith.constant 0 : index
    %4 = vector.load %arg3[%c0_2, %c0_3] : memref<8x128xf32, #tpu.memory_space<vmem>>, vector<1x128xf32>
    %5 = vector.broadcast %3 : vector<32x1xf32> to vector<32x128xf32>
    %6 = vector.broadcast %4 : vector<1x128xf32> to vector<32x128xf32>
    %7 = arith.addf %5, %6 : vector<32x128xf32>
    %cst = arith.constant 0.000000e+00 : f32
    %8 = vector.broadcast %cst : f32 to vector<32x128xf32>
    %9 = arith.cmpf ogt, %7, %8 : vector<32x128xf32>
    %cst_4 = arith.constant 2.000000e-01 : f32
    %10 = vector.broadcast %cst_4 : f32 to vector<32x128xf32>
    %11 = arith.mulf %10, %7 : vector<32x128xf32>
    %12 = arith.select %9, %7, %11 : vector<32x128xi1>, vector<32x128xf32>
    %c0_5 = arith.constant 0 : index
    %c0_6 = arith.constant 0 : index
    %13 = vector.load %arg4[%c0_5, %c0_6] : memref<32x128xi8, #tpu.memory_space<vmem>>, vector<32x128xi8>
    %c0_i8 = arith.constant 0 : i8
    %14 = vector.broadcast %c0_i8 : i8 to vector<32x128xi8>
    %15 = arith.cmpi ne, %13, %14 : vector<32x128xi8>
    %cst_7 = arith.constant -1.000000e+30 : f32
    %16 = vector.broadcast %cst_7 : f32 to vector<32x128xf32>
    %17 = arith.select %15, %12, %16 : vector<32x128xi1>, vector<32x128xf32>
    %c0_8 = arith.constant 0 : index
    %c0_9 = arith.constant 0 : index
    %18 = vector.load %arg9[%c0_8, %c0_9] : memref<32x1xf32, #tpu.memory_space<vmem>>, vector<32x1xf32>
    %cst_10 = arith.constant dense<0xFF800000> : vector<32xf32>
    %19 = vector.multi_reduction <maximumf>, %17, %cst_10 [1] : vector<32x128xf32> to vector<32xf32>
    %20 = vector.shape_cast %19 : vector<32xf32> to vector<32x1xf32>
    %21 = arith.maximumf %18, %20 : vector<32x1xf32>
    %22 = arith.subf %18, %21 : vector<32x1xf32>
    %23 = math.exp %22 : vector<32x1xf32>
    %24 = vector.broadcast %21 : vector<32x1xf32> to vector<32x128xf32>
    %25 = arith.subf %17, %24 : vector<32x128xf32>
    %26 = math.exp %25 : vector<32x128xf32>
    %c0_11 = arith.constant 0 : index
    %c0_12 = arith.constant 0 : index
    %27 = vector.load %arg10[%c0_11, %c0_12] : memref<32x1xf32, #tpu.memory_space<vmem>>, vector<32x1xf32>
    %28 = arith.mulf %23, %27 : vector<32x1xf32>
    %cst_13 = arith.constant dense<0.000000e+00> : vector<32xf32>
    %29 = vector.multi_reduction <add>, %26, %cst_13 [1] : vector<32x128xf32> to vector<32xf32>
    %30 = vector.shape_cast %29 : vector<32xf32> to vector<32x1xf32>
    %31 = arith.addf %28, %30 : vector<32x1xf32>
    %c0_14 = arith.constant 0 : index
    %c0_15 = arith.constant 0 : index
    %32 = vector.load %arg10[%c0_14, %c0_15] : memref<32x1xf32, #tpu.memory_space<vmem>>, vector<32x1xf32>
    tpu.vector_store %arg10[%c0_14, %c0_15], %31 {strides = array<i32>} : memref<32x1xf32, #tpu.memory_space<vmem>>, vector<32x1xf32>,
    %c0_16 = arith.constant 0 : index
    %c0_17 = arith.constant 0 : index
    %33 = vector.load %arg11[%c0_16, %c0_17] : memref<32x128xf32, #tpu.memory_space<vmem>>, vector<32x128xf32>
    %34 = vector.broadcast %23 : vector<32x1xf32> to vector<32x128xf32>
    %35 = arith.mulf %34, %33 : vector<32x128xf32>
    %36 = arith.truncf %26 : vector<32x128xf32> to vector<32x128xbf16>
    %c0_18 = arith.constant 0 : index
    %c0_19 = arith.constant 0 : index
    %37 = vector.load %arg5[%c0_18, %c0_19] : memref<128x128xbf16, #tpu.memory_space<vmem>>, vector<128x128xbf16>
    %cst_20 = arith.constant dense<0.000000e+00> : vector<32x128xf32>
    %38 = tpu.matmul %36, %37, %cst_20 {dimension_numbers = #tpu.dot_dimension_numbers<[1], [0], [0], [1], [0, 0, 1, 1], [], []>} : vector<32x128xbf16>, vector<128x128xbf16>, vector<32x128xf32> -> vector<32x128xf32>
    %39 = arith.addf %35, %38 : vector<32x128xf32>
    %c0_21 = arith.constant 0 : index
    %c0_22 = arith.constant 0 : index
    %40 = vector.load %arg11[%c0_21, %c0_22] : memref<32x128xf32, #tpu.memory_space<vmem>>, vector<32x128xf32>
    tpu.vector_store %arg11[%c0_21, %c0_22], %39 {strides = array<i32>} : memref<32x128xf32, #tpu.memory_space<vmem>>, vector<32x128xf32>,
    %c0_23 = arith.constant 0 : index
    %c0_24 = arith.constant 0 : index
    %41 = vector.load %arg9[%c0_23, %c0_24] : memref<32x1xf32, #tpu.memory_space<vmem>>, vector<32x1xf32>
    tpu.vector_store %arg9[%c0_23, %c0_24], %21 {strides = array<i32>} : memref<32x1xf32, #tpu.memory_space<vmem>>, vector<32x1xf32>,
    %c0_i32_25 = arith.constant 0 : i32
    %42 = arith.cmpi eq, %arg1, %c0_i32_25 : i32
    %43 = arith.extui %42 : i1 to i32
    %c0_i32_26 = arith.constant 0 : i32
    %44 = arith.cmpi ne, %43, %c0_i32_26 : i32
    scf.if %44 {
      %c0_27 = arith.constant 0 : index
      %c0_28 = arith.constant 0 : index
      %45 = vector.load %arg7[%c0_27, %c0_28] : memref<8x128xf32, #tpu.memory_space<vmem>>, vector<8x128xf32>
      %46 = vector.extract_strided_slice %45 {offsets = [0, 0], sizes = [1, 128], strides = [1, 1]} : vector<8x128xf32> to vector<1x128xf32>
      %47 = vector.extract_strided_slice %45 {offsets = [1, 0], sizes = [1, 128], strides = [1, 1]} : vector<8x128xf32> to vector<1x128xf32>
      %48 = vector.extract_strided_slice %45 {offsets = [2, 0], sizes = [1, 128], strides = [1, 1]} : vector<8x128xf32> to vector<1x128xf32>
      %c0_29 = arith.constant 0 : index
      %c0_30 = arith.constant 0 : index
      %49 = vector.load %arg10[%c0_29, %c0_30] : memref<32x1xf32, #tpu.memory_space<vmem>>, vector<32x1xf32>
      %50 = tpu.reciprocal %49 {approx = true} : vector<32x1xf32> -> vector<32x1xf32>
      %c0_31 = arith.constant 0 : index
      %c0_32 = arith.constant 0 : index
      %51 = vector.load %arg11[%c0_31, %c0_32] : memref<32x128xf32, #tpu.memory_space<vmem>>, vector<32x128xf32>
      %52 = vector.broadcast %50 : vector<32x1xf32> to vector<32x128xf32>
      %53 = arith.mulf %51, %52 : vector<32x128xf32>
      %54 = vector.broadcast %46 : vector<1x128xf32> to vector<32x128xf32>
      %55 = arith.addf %53, %54 : vector<32x128xf32>
      %cst_33 = arith.constant 0.000000e+00 : f32
      %56 = vector.broadcast %cst_33 : f32 to vector<32x128xf32>
      %57 = arith.cmpf ogt, %55, %56 : vector<32x128xf32>
      %cst_34 = arith.constant 0.000000e+00 : f32
      %58 = vector.broadcast %cst_34 : f32 to vector<32x128xf32>
      %59 = arith.minimumf %55, %58 : vector<32x128xf32>
      %60 = math.exp %59 : vector<32x128xf32>
      %cst_35 = arith.constant 1.000000e+00 : f32
      %61 = vector.broadcast %cst_35 : f32 to vector<32x128xf32>
      %62 = arith.subf %60, %61 : vector<32x128xf32>
      %63 = arith.select %57, %55, %62 : vector<32x128xi1>, vector<32x128xf32>
      %64 = arith.truncf %63 : vector<32x128xf32> to vector<32x128xbf16>
      %c0_36 = arith.constant 0 : index
      %c0_37 = arith.constant 0 : index
      %c0_38 = arith.constant 0 : index
      %65 = vector.load %arg6[%c0_36, %c0_37, %c0_38] : memref<2x128x128xbf16, #tpu.memory_space<vmem>>, vector<1x128x128xbf16>
      %66 = vector.shape_cast %65 : vector<1x128x128xbf16> to vector<128x128xbf16>
      %cst_39 = arith.constant dense<0.000000e+00> : vector<32x128xf32>
      %67 = tpu.matmul %64, %66, %cst_39 {dimension_numbers = #tpu.dot_dimension_numbers<[1], [0], [0], [1], [0, 0, 1, 1], [], []>} : vector<32x128xbf16>, vector<128x128xbf16>, vector<32x128xf32> -> vector<32x128xf32>
      %68 = vector.broadcast %47 : vector<1x128xf32> to vector<32x128xf32>
      %69 = arith.addf %67, %68 : vector<32x128xf32>
      %cst_40 = arith.constant 0.000000e+00 : f32
      %70 = vector.broadcast %cst_40 : f32 to vector<32x128xf32>
      %71 = arith.maximumf %69, %70 : vector<32x128xf32>
      %72 = arith.truncf %71 : vector<32x128xf32> to vector<32x128xbf16>
      %c1 = arith.constant 1 : index
      %c0_41 = arith.constant 0 : index
      %c0_42 = arith.constant 0 : index
      %73 = vector.load %arg6[%c1, %c0_41, %c0_42] : memref<2x128x128xbf16, #tpu.memory_space<vmem>>, vector<1x128x128xbf16>
      %74 = vector.shape_cast %73 : vector<1x128x128xbf16> to vector<128x128xbf16>
      %cst_43 = arith.constant dense<0.000000e+00> : vector<32x128xf32>
      %75 = tpu.matmul %72, %74, %cst_43 {dimension_numbers = #tpu.dot_dimension_numbers<[1], [0], [0], [1], [0, 0, 1, 1], [], []>} : vector<32x128xbf16>, vector<128x128xbf16>, vector<32x128xf32> -> vector<32x128xf32>
      %76 = vector.broadcast %48 : vector<1x128xf32> to vector<32x128xf32>
      %77 = arith.addf %75, %76 : vector<32x128xf32>
      %c0_44 = arith.constant 0 : index
      %c0_45 = arith.constant 0 : index
      %78 = vector.load %arg8[%c0_44, %c0_45] : memref<32x128xf32, #tpu.memory_space<vmem>>, vector<32x128xf32>
      tpu.vector_store %arg8[%c0_44, %c0_45], %77 {strides = array<i32>} : memref<32x128xf32, #tpu.memory_space<vmem>>, vector<32x128xf32>,
    } else {
    }
    return
  }
  func.func @transform_0(%arg0: i32, %arg1: i32) -> (i32, i32) {
    %c0_i32 = arith.constant 0 : i32
    %c0_i32_0 = arith.constant 0 : i32
    return %arg0, %c0_i32 : i32, i32
  }
  func.func @transform_1(%arg0: i32, %arg1: i32) -> (i32, i32) {
    %c0_i32 = arith.constant 0 : i32
    %c0_i32_0 = arith.constant 0 : i32
    return %c0_i32, %arg1 : i32, i32
  }
  func.func @transform_2(%arg0: i32, %arg1: i32) -> (i32, i32) {
    %c0_i32 = arith.constant 0 : i32
    return %arg0, %arg1 : i32, i32
  }
  func.func @transform_3(%arg0: i32, %arg1: i32) -> (i32, i32) {
    %c0_i32 = arith.constant 0 : i32
    %c0_i32_0 = arith.constant 0 : i32
    return %arg1, %c0_i32 : i32, i32
  }
  func.func @transform_4(%arg0: i32, %arg1: i32) -> (i32, i32, i32) {
    %c0_i32 = arith.constant 0 : i32
    %c0_i32_0 = arith.constant 0 : i32
    %c0_i32_1 = arith.constant 0 : i32
    %c0_i32_2 = arith.constant 0 : i32
    return %c0_i32, %c0_i32_0, %c0_i32_1 : i32, i32, i32
  }
  func.func @transform_5(%arg0: i32, %arg1: i32) -> (i32, i32) {
    %c0_i32 = arith.constant 0 : i32
    %c0_i32_0 = arith.constant 0 : i32
    %c0_i32_1 = arith.constant 0 : i32
    return %c0_i32, %c0_i32_0 : i32, i32
  }
  func.func @transform_6(%arg0: i32, %arg1: i32) -> (i32, i32) {
    %c0_i32 = arith.constant 0 : i32
    %c0_i32_0 = arith.constant 0 : i32
    return %arg0, %c0_i32 : i32, i32
  }
}

</mosaic_0001>

<llo_original>
// kernel: tpu_custom_call.1
$region0: #{tpu_custom_call.1}
  #allocation0 [shape = 'u32[]', space=smem, size = 0x4, offset = 0x4, fixed_abs, tag = 'smem constant byte address 0x4 - core index']
  #allocation1 [shape = 'u32[144,128]{1,0:T(1,128)}', space=vmem, size = 0x12000, scoped, tag = 'internal scratch']
  #allocation2 [shape = 'f32[32,1]{1,0:T(8,128)}', space=vmem, size = 0x4000, scoped, tag = 'scratch operand']
  #allocation3 [shape = 'f32[32,1]{1,0:T(8,128)}', space=vmem, size = 0x4000, scoped, tag = 'scratch operand']
  #allocation4 [shape = 'f32[32,128]{1,0:T(8,128)}', space=vmem, size = 0x4000, scoped, tag = 'scratch operand']
  %s0 = inlined_call_operand.vmem [shape: f32[128,8], index: 0, kind: input, shape index: {}]
  %s1 = inlined_call_operand.vmem [shape: f32[8,128], index: 1, kind: input, shape index: {}]
  %s2 = inlined_call_operand.hbm [shape: s8[128,128], index: 2, kind: input, shape index: {}]
  %s3 = inlined_call_operand.hbm [shape: bf16[128,128], index: 3, kind: input, shape index: {}]
  %s4 = inlined_call_operand.vmem [shape: bf16[2,128,128], index: 4, kind: input, shape index: {}]
  %s5 = inlined_call_operand.vmem [shape: f32[8,128], index: 5, kind: input, shape index: {}]
  %s6 = inlined_call_operand.hbm [shape: f32[128,128], index: 6, kind: output, shape index: {}]
  %s7 = sld [smem:[#allocation0]]
  $region73: #{tpu_custom_call.1} parent=0
    _
  %s9 = ssub.s32 1, %s7
  %s10 = scalar_select 0, %s9, %s7
  $region1: #{tpu_custom_call.1} parent=0
    #allocation5 [shape = 'u8[8192]{0}', space=vmem, size = 0x2000, scoped, tag = 'input window, operand 2']
    #allocation6 [shape = 's32[2]{0}', space=sflag, size = 0x8, scoped, tag = 'scoped memory for tpu_custom_call.1']
    #allocation7 [shape = 's32[2]{0}', space=sflag, size = 0x8, scoped, tag = 'scoped memory for tpu_custom_call.1']
    #allocation8 [shape = 'u8[32768]{0}', space=vmem, size = 0x8000, scoped, tag = 'input window, operand 3, single buffered']
    #allocation9 [shape = 's32[1]{0}', space=sflag, size = 0x4, scoped, tag = 'scoped memory for tpu_custom_call.1']
    #allocation10 [shape = 'u8[32768]{0}', space=vmem, size = 0x8000, scoped, tag = 'output window, operand 0']
    %11 = vsyncpa [#allocation6], 0
    %s12 = scalar_lea.sflag [#allocation6], 1
    %13 = vsyncpa %s12, 0
    %14 = vsyncpa [#allocation9], 0
    %15 = vsyncpa [#allocation7], 0
    %s16 = scalar_lea.sflag [#allocation7], 1
    %17 = vsyncpa %s16, 0
    loop: start=0, step=1, limit=6
    $region2: #{tpu_custom_call.1} parent=1 // loop_pre_header
      _
    $region3: #{tpu_custom_call.1} parent=1 // loop_header
      %s19 = sphi 0, %s23
      %p20 = scmp.ge.s32.totalorder %s19, 6
      %s26 = sphi 0, %s38
      %s27 = sphi 0, %s34
      %s28 = sphi 0, %s26
      %s29 = sphi 0, %s27
      %s30 = sphi 0, %s28
      %s31 = sphi 0, %s29
      %s41 = sphi 0, %s43
      %s44 = sphi 0, %s41
      %s45 = sphi 0, %s44
      %s61 = sphi 0, %s45
      %s67 = sphi 0, %s69
      %s70 = sphi 0, %s67
      %s71 = sphi 0, %s70
      %s87 = sphi 0, %s71
      %s95 = sphi 0, %s97
      %s98 = sphi 0, %s95
      %s99 = sphi 0, %s98
      %s115 = sphi 0, %s99
      %s121 = sphi 0, %s123
      %s124 = sphi 0, %s121
      %s125 = sphi 0, %s124
      %s141 = sphi 0, %s125
      %s145 = sphi 0, %s145
      %s147 = sphi 0, %s145
      %s148 = sphi 0, %s147
      %s162 = sphi 0, %s148
      %s166 = sphi 0, %s166
      %s168 = sphi 0, %s166
      %s169 = sphi 0, %s168
      %s183 = sphi 0, %s169
      %s189 = sphi 0, %s191
      %s192 = sphi 0, %s189
      %s193 = sphi 0, %s192
      %s209 = sphi 0, %s193
    $region4: #{tpu_custom_call.1} parent=1 // loop_header_branch
      %22 = sbr.rel (%p20) target = $region8
    $region5: #{tpu_custom_call.1} parent=1 // loop_body
      %s24 = ssub.s32 %s19, 1
      %s25 = ssub.s32 %s19, 2
      %s32 = sadd.s32 1, %s27
      %p33 = scmp.ge.s32.totalorder %s32, 1
      %s34 = scalar_select %p33, 0, %s32
      %s35 = sadd.s32 1, %s26
      %s36 = scalar_select %p33, %s35, %s26
      %p37 = scmp.ge.s32.totalorder %s36, 4
      %s38 = scalar_select %p37, 0, %s36
      %s39 = ssub.s32 %s26, %s38
      %p40 = scmp.eq.s32.totalorder %s39, 0
      %s42 = sadd.s32 %s41, 1
      %s43 = scalar_select %p40, %s41, %s42
      %p46 = pneg %p40
      %p47 = scmp.eq.s32.totalorder %s19, 3
      %p48 = por %p46, %p47
      %p49 = scmp.ne.s32.totalorder %s41, %s44
      %p50 = scmp.eq.s32.totalorder %s19, 0
      %p51 = por %p49, %p50
      %p52 = scmp.ne.s32.totalorder %s41, %s44
      %p53 = scmp.eq.s32.totalorder %s24, 3
      %p54 = por %p52, %p53
      %p55 = scmp.ne.s32.totalorder %s44, %s45
      %p56 = scmp.eq.s32.totalorder %s24, 0
      %p57 = por %p55, %p56
      %p58 = scmp.ne.s32.totalorder %s44, %s45
      %p59 = scmp.eq.s32.totalorder %s25, 3
      %p60 = por %p58, %p59
      %p62 = scmp.ne.s32.totalorder %s45, %s61
      %p63 = scmp.eq.s32.totalorder %s25, 0
      %p64 = por %p62, %p63
      %s65 = ssub.s32 %s27, %s34
      %p66 = scmp.eq.s32.totalorder %s65, 0
      %s68 = sadd.s32 %s67, 1
      %s69 = scalar_select %p66, %s67, %s68
      %p72 = pneg %p66
      %p73 = scmp.eq.s32.totalorder %s19, 3
      %p74 = por %p72, %p73
      %p75 = scmp.ne.s32.totalorder %s67, %s70
      %p76 = scmp.eq.s32.totalorder %s19, 0
      %p77 = por %p75, %p76
      %p78 = scmp.ne.s32.totalorder %s67, %s70
      %p79 = scmp.eq.s32.totalorder %s24, 3
      %p80 = por %p78, %p79
      %p81 = scmp.ne.s32.totalorder %s70, %s71
      %p82 = scmp.eq.s32.totalorder %s24, 0
      %p83 = por %p81, %p82
      %p84 = scmp.ne.s32.totalorder %s70, %s71
      %p85 = scmp.eq.s32.totalorder %s25, 3
      %p86 = por %p84, %p85
      %p88 = scmp.ne.s32.totalorder %s71, %s87
      %p89 = scmp.eq.s32.totalorder %s25, 0
      %p90 = por %p88, %p89
      %s91 = ssub.s32 %s26, %s38
      %s92 = ssub.s32 %s27, %s34
      %s93 = sor.u32 %s91, %s92
      %p94 = scmp.eq.s32.totalorder %s93, 0
      %s96 = sadd.s32 %s95, 1
      %s97 = scalar_select %p94, %s95, %s96
      %p100 = pneg %p94
      %p101 = scmp.eq.s32.totalorder %s19, 3
      %p102 = por %p100, %p101
      %p103 = scmp.ne.s32.totalorder %s95, %s98
      %p104 = scmp.eq.s32.totalorder %s19, 0
      %p105 = por %p103, %p104
      %p106 = scmp.ne.s32.totalorder %s95, %s98
      %p107 = scmp.eq.s32.totalorder %s24, 3
      %p108 = por %p106, %p107
      %p109 = scmp.ne.s32.totalorder %s98, %s99
      %p110 = scmp.eq.s32.totalorder %s24, 0
      %p111 = por %p109, %p110
      %p112 = scmp.ne.s32.totalorder %s98, %s99
      %p113 = scmp.eq.s32.totalorder %s25, 3
      %p114 = por %p112, %p113
      %p116 = scmp.ne.s32.totalorder %s99, %s115
      %p117 = scmp.eq.s32.totalorder %s25, 0
      %p118 = por %p116, %p117
      %s119 = ssub.s32 %s27, %s34
      %p120 = scmp.eq.s32.totalorder %s119, 0
      %s122 = sadd.s32 %s121, 1
      %s123 = scalar_select %p120, %s121, %s122
      %p126 = pneg %p120
      %p127 = scmp.eq.s32.totalorder %s19, 3
      %p128 = por %p126, %p127
      %p129 = scmp.ne.s32.totalorder %s121, %s124
      %p130 = scmp.eq.s32.totalorder %s19, 0
      %p131 = por %p129, %p130
      %p132 = scmp.ne.s32.totalorder %s121, %s124
      %p133 = scmp.eq.s32.totalorder %s24, 3
      %p134 = por %p132, %p133
      %p135 = scmp.ne.s32.totalorder %s124, %s125
      %p136 = scmp.eq.s32.totalorder %s24, 0
      %p137 = por %p135, %p136
      %p138 = scmp.ne.s32.totalorder %s124, %s125
      %p139 = scmp.eq.s32.totalorder %s25, 3
      %p140 = por %p138, %p139
      %p142 = scmp.ne.s32.totalorder %s125, %s141
      %p143 = scmp.eq.s32.totalorder %s25, 0
      %p144 = por %p142, %p143
      %s146 = sadd.s32 %s145, 1
      %p149 = scmp.eq.s32.totalorder %s19, 3
      %p150 = scmp.ne.s32.totalorder %s145, %s147
      %p151 = scmp.eq.s32.totalorder %s19, 0
      %p152 = por %p150, %p151
      %p153 = scmp.ne.s32.totalorder %s145, %s147
      %p154 = scmp.eq.s32.totalorder %s24, 3
      %p155 = por %p153, %p154
      %p156 = scmp.ne.s32.totalorder %s147, %s148
      %p157 = scmp.eq.s32.totalorder %s24, 0
      %p158 = por %p156, %p157
      %p159 = scmp.ne.s32.totalorder %s147, %s148
      %p160 = scmp.eq.s32.totalorder %s25, 3
      %p161 = por %p159, %p160
      %p163 = scmp.ne.s32.totalorder %s148, %s162
      %p164 = scmp.eq.s32.totalorder %s25, 0
      %p165 = por %p163, %p164
      %s167 = sadd.s32 %s166, 1
      %p170 = scmp.eq.s32.totalorder %s19, 3
      %p171 = scmp.ne.s32.totalorder %s166, %s168
      %p172 = scmp.eq.s32.totalorder %s19, 0
      %p173 = por %p171, %p172
      %p174 = scmp.ne.s32.totalorder %s166, %s168
      %p175 = scmp.eq.s32.totalorder %s24, 3
      %p176 = por %p174, %p175
      %p177 = scmp.ne.s32.totalorder %s168, %s169
      %p178 = scmp.eq.s32.totalorder %s24, 0
      %p179 = por %p177, %p178
      %p180 = scmp.ne.s32.totalorder %s168, %s169
      %p181 = scmp.eq.s32.totalorder %s25, 3
      %p182 = por %p180, %p181
      %p184 = scmp.ne.s32.totalorder %s169, %s183
      %p185 = scmp.eq.s32.totalorder %s25, 0
      %p186 = por %p184, %p185
      %s187 = ssub.s32 %s26, %s38
      %p188 = scmp.eq.s32.totalorder %s187, 0
      %s190 = sadd.s32 %s189, 1
      %s191 = scalar_select %p188, %s189, %s190
      %p194 = pneg %p188
      %p195 = scmp.eq.s32.totalorder %s19, 3
      %p196 = por %p194, %p195
      %p197 = scmp.ne.s32.totalorder %s189, %s192
      %p198 = scmp.eq.s32.totalorder %s19, 0
      %p199 = por %p197, %p198
      %p200 = scmp.ne.s32.totalorder %s189, %s192
      %p201 = scmp.eq.s32.totalorder %s24, 3
      %p202 = por %p200, %p201
      %p203 = scmp.ne.s32.totalorder %s192, %s193
      %p204 = scmp.eq.s32.totalorder %s24, 0
      %p205 = por %p203, %p204
      %p206 = scmp.ne.s32.totalorder %s192, %s193
      %p207 = scmp.eq.s32.totalorder %s25, 3
      %p208 = por %p206, %p207
      %p210 = scmp.ne.s32.totalorder %s193, %s209
      %p211 = scmp.eq.s32.totalorder %s25, 0
      %p212 = por %p210, %p211
      %p213 = scmp.le.s32.totalorder 1, %s19
      %p214 = scmp.lt.s32.totalorder %s19, 5
      %p215 = pnand %p213, %p214
      %p216 = pneg %p215
      // Predicated region
      $region9: #{tpu_custom_call.1} parent=5 // pred_check
        _
      $region10: #{tpu_custom_call.1} parent=5 // pred_check_branch
        %218 = sbr.rel (%p215) target = $region12
      $region11: #{tpu_custom_call.1} parent=5 // pred_region
        %s219 = ssub.s32 %s19, 1
        // Predicated region
        $region13: #{tpu_custom_call.1} parent=11 // pred_check
          %p220 = pneg %p83
        $region14: #{tpu_custom_call.1} parent=11 // pred_check_branch
          %222 = sbr.rel (%p220) target = $region16
        $region15: #{tpu_custom_call.1} parent=11 // pred_region
          %p223 = scmp.lt.s32.totalorder %s29, 0
          %s224 = scalar_select %p223, %s29, 0
          %s225 = smul.addr %s224, 8
          %s226 = scalar_lea.vmem %s1, %s225
        $region16: #{tpu_custom_call.1} parent=11 // pred_fallthru
          _
        // Predicated region
        $region17: #{tpu_custom_call.1} parent=11 // pred_check
          %p227 = pneg %p137
        $region18: #{tpu_custom_call.1} parent=11 // pred_check_branch
          %229 = sbr.rel (%p227) target = $region20
        $region19: #{tpu_custom_call.1} parent=11 // pred_region
          %s230 = smul.u32 16, %s29
          %s232 = ssub.s32 1024, 1024
          %233 = vsyncadd [#allocation9], %s232
          %s234 = smul.addr %s230, 64
          %s235 = scalar_lea.hbm %s3, %s234
          %s236 = sshll.u32 [#allocation8], 4
          %s237 = int_to_ptr.vmem [resolvable:$true] %s236
          %242 = dma.hbm_to_vmem [thread:$0]  %s235, 1024, %s237, [#allocation9], 64, 64, 4
        $region20: #{tpu_custom_call.1} parent=11 // pred_fallthru
          _
        // Predicated region
        $region21: #{tpu_custom_call.1} parent=11 // pred_check
          %p243 = pneg %p158
        $region22: #{tpu_custom_call.1} parent=11 // pred_check_branch
          %245 = sbr.rel (%p243) target = $region24
        $region23: #{tpu_custom_call.1} parent=11 // pred_region
          _
        $region24: #{tpu_custom_call.1} parent=11 // pred_fallthru
          _
        // Predicated region
        $region25: #{tpu_custom_call.1} parent=11 // pred_check
          %p246 = pneg %p179
        $region26: #{tpu_custom_call.1} parent=11 // pred_check_branch
          %248 = sbr.rel (%p246) target = $region28
        $region27: #{tpu_custom_call.1} parent=11 // pred_region
          _
        $region28: #{tpu_custom_call.1} parent=11 // pred_fallthru
          _
      $region12: #{tpu_custom_call.1} parent=5 // pred_fallthru
        _
      %p249 = scmp.lt.s32.totalorder %s19, 4
      // Predicated region
      $region29: #{tpu_custom_call.1} parent=5 // pred_check
        %p250 = pneg %p249
      $region30: #{tpu_custom_call.1} parent=5 // pred_check_branch
        %252 = sbr.rel (%p250) target = $region32
      $region31: #{tpu_custom_call.1} parent=5 // pred_region
        // Predicated region
        $region33: #{tpu_custom_call.1} parent=31 // pred_check
          %p253 = pneg %p51
        $region34: #{tpu_custom_call.1} parent=31 // pred_check_branch
          %255 = sbr.rel (%p253) target = $region36
        $region35: #{tpu_custom_call.1} parent=31 // pred_region
          %s256 = smul.u32 4, %s26
          %p257 = scmp.lt.s32.totalorder %s256, 15
          %s258 = scalar_select %p257, %s256, 15
          %s259 = smul.addr %s258, 8
          %s260 = scalar_lea.vmem %s0, %s259
          %s261 = smul.u32 4, %s26
        $region36: #{tpu_custom_call.1} parent=31 // pred_fallthru
          _
        // Predicated region
        $region37: #{tpu_custom_call.1} parent=31 // pred_check
          %p262 = pneg %p105
        $region38: #{tpu_custom_call.1} parent=31 // pred_check_branch
          %264 = sbr.rel (%p262) target = $region40
        $region39: #{tpu_custom_call.1} parent=31 // pred_region
          %s265 = sand.u32 %s95, 1
          %s266 = scalar_lea.sflag [#allocation6], %s265
          %s267 = sand.u32 %s95, 1
          %s268 = smul.addr %s267, 8
          %s269 = scalar_lea.vmem [#allocation5], %s268
          %s271 = ssub.s32 128, 128
          %272 = vsyncadd %s266, %s271
          %s273 = sadd.s32 %s27, %s26
          %s274 = smul.addr %s273, 128
          %s275 = scalar_lea.hbm %s2, %s274
          %s277 = sshll.u32 %s269, 4
          %s278 = int_to_ptr.vmem [resolvable:$true] %s277
          %280 = dma.hbm_to_vmem [thread:$0]  %s275, 128, %s278, %s266
        $region40: #{tpu_custom_call.1} parent=31 // pred_fallthru
          _
      $region32: #{tpu_custom_call.1} parent=5 // pred_fallthru
        _
      %p281 = scmp.le.s32.totalorder 1, %s19
      %p282 = scmp.lt.s32.totalorder %s19, 5
      %p283 = pnand %p281, %p282
      %p284 = pneg %p283
      // Predicated region
      $region41: #{tpu_custom_call.1} parent=5 // pred_check
        _
      $region42: #{tpu_custom_call.1} parent=5 // pred_check_branch
        %286 = sbr.rel (%p283) target = $region44
      $region43: #{tpu_custom_call.1} parent=5 // pred_region
        %s287 = ssub.s32 %s19, 1
        %s288 = sand.u32 %s98, 1
        %s289 = scalar_lea.sflag [#allocation6], %s288
        %s290 = sand.u32 %s98, 1
        %s291 = smul.addr %s290, 8
        %s292 = scalar_lea.vmem [#allocation5], %s291
        // Predicated region
        $region45: #{tpu_custom_call.1} parent=43 // pred_check
          %p293 = pneg %p111
        $region46: #{tpu_custom_call.1} parent=43 // pred_check_branch
          %295 = sbr.rel (%p293) target = $region48
        $region47: #{tpu_custom_call.1} parent=43 // pred_region
          %296 = dma.done %s289, 128
        $region48: #{tpu_custom_call.1} parent=43 // pred_fallthru
          _
        // Predicated region
        $region49: #{tpu_custom_call.1} parent=43 // pred_check
          %p297 = pneg %p137
        $region50: #{tpu_custom_call.1} parent=43 // pred_check_branch
          %299 = sbr.rel (%p297) target = $region52
        $region51: #{tpu_custom_call.1} parent=43 // pred_region
          %300 = dma.done [#allocation9], 1024
        $region52: #{tpu_custom_call.1} parent=43 // pred_fallthru
          _
        %s301 = smul.u32 4, %s28
        %p302 = scmp.lt.s32.totalorder %s301, 15
        %s303 = scalar_select %p302, %s301, 15
        %s304 = smul.addr %s303, 8
        %s305 = scalar_lea.vmem %s0, %s304
        %p306 = pneg %p57
        %p307 = pneg %p54
        %p308 = scmp.lt.s32.totalorder %s29, 0
        %s309 = scalar_select %p308, %s29, 0
        %s310 = smul.addr %s309, 8
        %s311 = scalar_lea.vmem %s1, %s310
        %p312 = pneg %p83
        %p313 = pneg %p80
        %s314 = sand.u32 %s98, 1
        %s315 = scalar_lea.sflag [#allocation6], %s314
        %s316 = sand.u32 %s98, 1
        %s317 = smul.addr %s316, 8
        %s318 = scalar_lea.vmem [#allocation5], %s317
        %p319 = pneg %p111
        %p320 = pneg %p108
        %p321 = pneg %p137
        %p322 = pneg %p134
        %p323 = pneg %p158
        %p324 = pneg %p155
        %p325 = pneg %p179
        %p326 = pneg %p176
        %p327 = pneg %p205
        %p328 = pneg %p202
        %s329 = sand.u32 %s192, 1
        %s330 = scalar_lea.sflag [#allocation7], %s329
        %s331 = sand.u32 %s192, 1
        %s332 = smul.addr %s331, 32
        %s333 = scalar_lea.vmem [#allocation10], %s332
        %s334 = smul.u32 4, %s28
        %p335 = scmp.lt.s32.totalorder %s334, 15
        %s336 = scalar_select %p335, %s334, 15
        %s337 = smul.addr %s336, 8
        %s338 = scalar_lea.vmem %s0, %s337
        %s339 = smul.u32 4, %s28
        %p340 = scmp.lt.s32.totalorder %s29, 0
        %s341 = scalar_select %p340, %s29, 0
        %s342 = smul.addr %s341, 8
        %s343 = scalar_lea.vmem %s1, %s342
        %s344 = smul.u32 16, %s29
        %s345 = smul.u32 4, %s28
        %p349 = scmp.eq.s32.totalorder %s29, 0
        // Predicated region
        $region53: #{tpu_custom_call.1} parent=43 // pred_check
          %p350 = pneg %p349
        $region54: #{tpu_custom_call.1} parent=43 // pred_check_branch
          %352 = sbr.rel (%p350) target = $region56
        $region55: #{tpu_custom_call.1} parent=43 // pred_region
          %vm353 = vcmask 7168
          %354 = vst.msk [vmem:[#allocation2] sm:$0xff] %vm353, -1e+30
          %355 = vst.msk [vmem:[#allocation2 + $0x8] sm:$0xff] %vm353, -1e+30
          %356 = vst.msk [vmem:[#allocation2 + $0x10] sm:$0xff] %vm353, -1e+30
          %357 = vst.msk [vmem:[#allocation2 + $0x18] sm:$0xff] %vm353, -1e+30
          %358 = vst.msk [vmem:[#allocation3] sm:$0xff] %vm353, 0.0
          %359 = vst.msk [vmem:[#allocation3 + $0x8] sm:$0xff] %vm353, 0.0
          %360 = vst.msk [vmem:[#allocation3 + $0x10] sm:$0xff] %vm353, 0.0
          %361 = vst.msk [vmem:[#allocation3 + $0x18] sm:$0xff] %vm353, 0.0
          %362 = vst [vmem:[#allocation4] sm:$0xff] 0.0
          %363 = vst [vmem:[#allocation4 + $0x8] sm:$0xff] 0.0
          %364 = vst [vmem:[#allocation4 + $0x10] sm:$0xff] 0.0
          %365 = vst [vmem:[#allocation4 + $0x18] sm:$0xff] 0.0
        $region56: #{tpu_custom_call.1} parent=43 // pred_fallthru
          _
        %v366 = vld [vmem:[%s338] sm:$0xff]
        %v367 = vld [vmem:[%s338 + $0x8] sm:$0xff]
        %v368 = vld [vmem:[%s338 + $0x10] sm:$0xff]
        %v369 = vld [vmem:[%s338 + $0x18] sm:$0xff]
        %v370 = vld [vmem:[%s343] sm:$0x1]
        %372 = vset.pattern.permute.xlu0 0
        %373 = vperm.xlu0 %372, %v366
        %v374 = vpop.permute.xlu0 %373
        %377 = vset.pattern.permute.xlu0 0
        %378 = vperm.xlu0 %377, %v367
        %v379 = vpop.permute.xlu0 %378
        %382 = vset.pattern.permute.xlu0 0
        %383 = vperm.xlu0 %382, %v368
        %v384 = vpop.permute.xlu0 %383
        %387 = vset.pattern.permute.xlu0 0
        %388 = vperm.xlu0 %387, %v369
        %v389 = vpop.permute.xlu0 %388
        %v391 = vlaneseq
        %v392 = vshrl.u32 %v391, 7
        %v393 = vsub.s32 0, %v392
        %v394 = vrot.slane %v370, %v393
        %v395 = vadd.f32 %v374, %v394
        %v396 = vadd.f32 %v379, %v394
        %v397 = vadd.f32 %v384, %v394
        %v398 = vadd.f32 %v389, %v394
        %vm399 = vcmp.gt.f32.partialorder %v395, 0.0
        %vm400 = vcmp.gt.f32.partialorder %v396, 0.0
        %vm401 = vcmp.gt.f32.partialorder %v397, 0.0
        %vm402 = vcmp.gt.f32.partialorder %v398, 0.0
        %v403 = vmul.f32 %v395, 0.2
        %v404 = vmul.f32 %v396, 0.2
        %v405 = vmul.f32 %v397, 0.2
        %v406 = vmul.f32 %v398, 0.2
        %v407 = vsel %vm399, %v395, %v403
        %v408 = vsel %vm400, %v396, %v404
        %v409 = vsel %vm401, %v397, %v405
        %v410 = vsel %vm402, %v398, %v406
        %v411 = vld [vmem:[%s292] sm:$0xff]
        %vm412 = vnez %v411
        %v413 = vsel %vm412, 16843009, 0
        %v414 = vunpack.c.0.s8 %v413
        %v415 = vunpack.c.1.s8 %v413
        %v416 = vunpack.c.2.s8 %v413
        %v417 = vunpack.c.3.s8 %v413
        %v418 = vpack.c.b16 %v414, %v414
        %v419 = vpack.c.b8 %v418, %v418
        %v420 = vpack.c.b16 %v415, %v415
        %v421 = vpack.c.b8 %v420, %v420
        %v422 = vpack.c.b16 %v416, %v416
        %v423 = vpack.c.b8 %v422, %v422
        %v424 = vpack.c.b16 %v417, %v417
        %v425 = vpack.c.b8 %v424, %v424
        %vm426 = vnez %v419
        %vm427 = vnez %v421
        %vm428 = vnez %v423
        %vm429 = vnez %v425
        %v430 = vsel %vm426, 16843009, 0
        %v431 = vsel %vm427, 16843009, 0
        %v432 = vsel %vm428, 16843009, 0
        %v433 = vsel %vm429, 16843009, 0
        %v434 = vunpack.c.0.s8 %v430
        %v435 = vunpack.c.0.s8 %v431
        %v436 = vunpack.c.0.s8 %v432
        %v437 = vunpack.c.0.s8 %v433
        %vm438 = vcmp.ne.s32.totalorder %v434, 0
        %vm439 = vcmp.ne.s32.totalorder %v435, 0
        %vm440 = vcmp.ne.s32.totalorder %v436, 0
        %vm441 = vcmp.ne.s32.totalorder %v437, 0
        %v442 = vsel %vm438, %v407, -1e+30
        %v443 = vsel %vm439, %v408, -1e+30
        %v444 = vsel %vm440, %v409, -1e+30
        %v445 = vsel %vm441, %v410, -1e+30
        %v446 = vld [vmem:[#allocation2] sm:$0xff]
        %v447 = vld [vmem:[#allocation2 + $0x8] sm:$0xff]
        %v448 = vld [vmem:[#allocation2 + $0x10] sm:$0xff]
        %v449 = vld [vmem:[#allocation2 + $0x18] sm:$0xff]
        %450 = vmax.xlane.f32.xlu0 %v442
        %v451 = vpop.xlane.xlu0 %450
        %452 = vmax.xlane.f32.xlu0 %v443
        %v453 = vpop.xlane.xlu0 %452
        %454 = vmax.xlane.f32.xlu0 %v444
        %v455 = vpop.xlane.xlu0 %454
        %456 = vmax.xlane.f32.xlu0 %v445
        %v457 = vpop.xlane.xlu0 %456
        %v458 = vmax.f32 %v446, %v451
        %v459 = vmax.f32 %v447, %v453
        %v460 = vmax.f32 %v448, %v455
        %v461 = vmax.f32 %v449, %v457
        %v462 = vsub.f32 %v446, %v458
        %v463 = vsub.f32 %v447, %v459
        %v464 = vsub.f32 %v448, %v460
        %v465 = vsub.f32 %v449, %v461
        %v466 = vmul.f32 %v462, 1.442695
        %v467 = vpow.pop %v466
        %v468 = vmul.f32 %v463, 1.442695
        %v469 = vpow.pop %v468
        %v470 = vmul.f32 %v464, 1.442695
        %v471 = vpow.pop %v470
        %v472 = vmul.f32 %v465, 1.442695
        %v473 = vpow.pop %v472
        %475 = vset.pattern.permute.xlu0 0
        %476 = vperm.xlu0 %475, %v458
        %v477 = vpop.permute.xlu0 %476
        %480 = vset.pattern.permute.xlu0 0
        %481 = vperm.xlu0 %480, %v459
        %v482 = vpop.permute.xlu0 %481
        %485 = vset.pattern.permute.xlu0 0
        %486 = vperm.xlu0 %485, %v460
        %v487 = vpop.permute.xlu0 %486
        %490 = vset.pattern.permute.xlu0 0
        %491 = vperm.xlu0 %490, %v461
        %v492 = vpop.permute.xlu0 %491
        %v494 = vsub.f32 %v442, %v477
        %v495 = vsub.f32 %v443, %v482
        %v496 = vsub.f32 %v444, %v487
        %v497 = vsub.f32 %v445, %v492
        %v498 = vmul.f32 %v494, 1.442695
        %v499 = vpow.pop %v498
        %v500 = vmul.f32 %v495, 1.442695
        %v501 = vpow.pop %v500
        %v502 = vmul.f32 %v496, 1.442695
        %v503 = vpow.pop %v502
        %v504 = vmul.f32 %v497, 1.442695
        %v505 = vpow.pop %v504
        %v506 = vld [vmem:[#allocation3] sm:$0xff]
        %v507 = vld [vmem:[#allocation3 + $0x8] sm:$0xff]
        %v508 = vld [vmem:[#allocation3 + $0x10] sm:$0xff]
        %v509 = vld [vmem:[#allocation3 + $0x18] sm:$0xff]
        %v510 = vmul.f32 %v467, %v506
        %v511 = vmul.f32 %v469, %v507
        %v512 = vmul.f32 %v471, %v508
        %v513 = vmul.f32 %v473, %v509
        %514 = vadd.xlane.f32.xlu0 %v499
        %v515 = vpop.xlane.xlu0 %514
        %516 = vadd.xlane.f32.xlu0 %v501
        %v517 = vpop.xlane.xlu0 %516
        %518 = vadd.xlane.f32.xlu0 %v503
        %v519 = vpop.xlane.xlu0 %518
        %520 = vadd.xlane.f32.xlu0 %v505
        %v521 = vpop.xlane.xlu0 %520
        %v522 = vadd.f32 %v510, %v515
        %v523 = vadd.f32 %v511, %v517
        %v524 = vadd.f32 %v512, %v519
        %v525 = vadd.f32 %v513, %v521
        %vm526 = vcmask 7168
        %527 = vst.msk [vmem:[#allocation3] sm:$0xff] %vm526, %v522
        %528 = vst.msk [vmem:[#allocation3 + $0x8] sm:$0xff] %vm526, %v523
        %529 = vst.msk [vmem:[#allocation3 + $0x10] sm:$0xff] %vm526, %v524
        %530 = vst.msk [vmem:[#allocation3 + $0x18] sm:$0xff] %vm526, %v525
        %v531 = vld [vmem:[#allocation4] sm:$0xff]
        %v532 = vld [vmem:[#allocation4 + $0x8] sm:$0xff]
        %v533 = vld [vmem:[#allocation4 + $0x10] sm:$0xff]
        %v534 = vld [vmem:[#allocation4 + $0x18] sm:$0xff]
        %536 = vset.pattern.permute.xlu0 0
        %537 = vperm.xlu0 %536, %v467
        %v538 = vpop.permute.xlu0 %537
        %541 = vset.pattern.permute.xlu0 0
        %542 = vperm.xlu0 %541, %v469
        %v543 = vpop.permute.xlu0 %542
        %546 = vset.pattern.permute.xlu0 0
        %547 = vperm.xlu0 %546, %v471
        %v548 = vpop.permute.xlu0 %547
        %551 = vset.pattern.permute.xlu0 0
        %552 = vperm.xlu0 %551, %v473
        %v553 = vpop.permute.xlu0 %552
        %v555 = vmul.f32 %v538, %v531
        %v556 = vmul.f32 %v543, %v532
        %v557 = vmul.f32 %v548, %v533
        %v558 = vmul.f32 %v553, %v534
        %v559 = vpack.c.bf16 %v501, %v499
        %v560 = vpack.c.bf16 %v505, %v503
        %v561 = vld [vmem:[#allocation8] sm:$0xf]
        %v562 = vld [vmem:[#allocation8 + $0x4] sm:$0xf]
        %v563 = vld [vmem:[#allocation8 + $0x8] sm:$0xf]
        %v564 = vld [vmem:[#allocation8 + $0xc] sm:$0xf]
        %v565 = vld [vmem:[#allocation8 + $0x10] sm:$0xf]
        %v566 = vld [vmem:[#allocation8 + $0x14] sm:$0xf]
        %v567 = vld [vmem:[#allocation8 + $0x18] sm:$0xf]
        %v568 = vld [vmem:[#allocation8 + $0x1c] sm:$0xf]
        %v569 = vld [vmem:[#allocation8 + $0x20] sm:$0xf]
        %v570 = vld [vmem:[#allocation8 + $0x24] sm:$0xf]
        %v571 = vld [vmem:[#allocation8 + $0x28] sm:$0xf]
        %v572 = vld [vmem:[#allocation8 + $0x2c] sm:$0xf]
        %v573 = vld [vmem:[#allocation8 + $0x30] sm:$0xf]
        %v574 = vld [vmem:[#allocation8 + $0x34] sm:$0xf]
        %v575 = vld [vmem:[#allocation8 + $0x38] sm:$0xf]
        %v576 = vld [vmem:[#allocation8 + $0x3c] sm:$0xf]
        %v593 = vunpack.c.l.b16 %v561
        %v594 = vunpack.c.l.b16 %v562
        %v595 = vunpack.c.l.b16 %v563
        %v596 = vunpack.c.l.b16 %v564
        %v597 = vunpack.c.l.b16 %v565
        %v598 = vunpack.c.l.b16 %v566
        %v599 = vunpack.c.l.b16 %v567
        %v600 = vunpack.c.l.b16 %v568
        %v601 = vunpack.c.l.b16 %v569
        %v602 = vunpack.c.l.b16 %v570
        %v603 = vunpack.c.l.b16 %v571
        %v604 = vunpack.c.l.b16 %v572
        %v605 = vunpack.c.l.b16 %v573
        %v606 = vunpack.c.l.b16 %v574
        %v607 = vunpack.c.l.b16 %v575
        %v608 = vunpack.c.l.b16 %v576
        %v609 = vpack.c.b16 %v594, %v593
        %v610 = vpack.c.b16 %v596, %v595
        %v611 = vpack.c.b16 %v598, %v597
        %v612 = vpack.c.b16 %v600, %v599
        %v613 = vpack.c.b16 %v602, %v601
        %v614 = vpack.c.b16 %v604, %v603
        %v615 = vpack.c.b16 %v606, %v605
        %v616 = vpack.c.b16 %v608, %v607
        %625 = vmatprep.subr.bf16.mxu0 0
        %626 = vmatpush1.bf16.msra.mxu0 %v609
        %627 = vmatprep.subr.bf16.mxu0 0
        %628 = vmatpush1.bf16.msra.mxu0 %v610
        %629 = vmatprep.subr.bf16.mxu0 0
        %630 = vmatpush1.bf16.msra.mxu0 %v611
        %631 = vmatprep.subr.bf16.mxu0 0
        %632 = vmatpush1.bf16.msra.mxu0 %v612
        %633 = vmatprep.subr.bf16.mxu0 0
        %634 = vmatpush1.bf16.msra.mxu0 %v613
        %635 = vmatprep.subr.bf16.mxu0 0
        %636 = vmatpush1.bf16.msra.mxu0 %v614
        %637 = vmatprep.subr.bf16.mxu0 0
        %638 = vmatpush1.bf16.msra.mxu0 %v615
        %639 = vmatprep.subr.bf16.mxu0 0
        %640 = vmatpush1.bf16.msra.mxu0 %v616
        %641 = vmatprep.subr.bf16.mxu0 0
        %642 = vmatpush1.bf16.msra.mxu0 0
        %643 = vmatprep.subr.bf16.mxu0 0
        %644 = vmatpush1.bf16.msra.mxu0 0
        %645 = vmatprep.subr.bf16.mxu0 0
        %646 = vmatpush1.bf16.msra.mxu0 0
        %647 = vmatprep.subr.bf16.mxu0 0
        %648 = vmatpush1.bf16.msra.mxu0 0
        %649 = vmatprep.subr.bf16.mxu0 0
        %650 = vmatpush1.bf16.msra.mxu0 0
        %651 = vmatprep.subr.bf16.mxu0 0
        %652 = vmatpush1.bf16.msra.mxu0 0
        %653 = vmatprep.subr.bf16.mxu0 0
        %654 = vmatpush1.bf16.msra.mxu0 0
        %655 = vmatprep.subr.bf16.mxu0 0
        %656 = vmatpush1.bf16.msra.mxu0 0
        %657 = vmatprep.mubr.bf16.mxu0 0
        %658 = vmatmul.mubr.bf16.gmra.mrb[0].mxu0 %v559
        %v659 = vpop.f32.mrb[0].mxu0
        %v660 = vadd.f32 0.0, %v659
        %v661 = vpop.f32.mrb[0].mxu0
        %v662 = vpop.f32.mrb[0].mxu0
        %v663 = vadd.f32 0.0, %v662
        %v664 = vpop.f32.mrb[0].mxu0
        %665 = vmatprep.mubr.bf16.mxu0 0
        %666 = vmatmul.mubr.bf16.gmra.mrb[0].mxu0 %v560
        %v667 = vpop.f32.mrb[0].mxu0
        %v668 = vadd.f32 0.0, %v667
        %v669 = vpop.f32.mrb[0].mxu0
        %v670 = vpop.f32.mrb[0].mxu0
        %v671 = vadd.f32 0.0, %v670
        %v672 = vpop.f32.mrb[0].mxu0
        %673 = vdwg.mxu0
        %v674 = vadd.f32 %v555, %v660
        %v675 = vadd.f32 %v556, %v663
        %v676 = vadd.f32 %v557, %v668
        %v677 = vadd.f32 %v558, %v671
        %678 = vst [vmem:[#allocation4] sm:$0xff] %v674
        %679 = vst [vmem:[#allocation4 + $0x8] sm:$0xff] %v675
        %680 = vst [vmem:[#allocation4 + $0x10] sm:$0xff] %v676
        %681 = vst [vmem:[#allocation4 + $0x18] sm:$0xff] %v677
        %682 = vst.msk [vmem:[#allocation2] sm:$0xff] %vm526, %v458
        %683 = vst.msk [vmem:[#allocation2 + $0x8] sm:$0xff] %vm526, %v459
        %684 = vst.msk [vmem:[#allocation2 + $0x10] sm:$0xff] %vm526, %v460
        %685 = vst.msk [vmem:[#allocation2 + $0x18] sm:$0xff] %vm526, %v461
        // Predicated region
        $region57: #{tpu_custom_call.1} parent=43 // pred_check
          %p686 = pneg %p349
        $region58: #{tpu_custom_call.1} parent=43 // pred_check_branch
          %688 = sbr.rel (%p686) target = $region60
        $region59: #{tpu_custom_call.1} parent=43 // pred_region
          %v689 = vld [vmem:[%s5] sm:$0xff]
          %v690 = vld [vmem:[#allocation3] sm:$0xff]
          %v691 = vld [vmem:[#allocation3 + $0x8] sm:$0xff]
          %v692 = vld [vmem:[#allocation3 + $0x10] sm:$0xff]
          %v693 = vld [vmem:[#allocation3 + $0x18] sm:$0xff]
          %v694 = vrcp.pop %v690
          %v695 = vrcp.pop %v691
          %v696 = vrcp.pop %v692
          %v697 = vrcp.pop %v693
          %v698 = vld [vmem:[#allocation4] sm:$0xff]
          %v699 = vld [vmem:[#allocation4 + $0x8] sm:$0xff]
          %v700 = vld [vmem:[#allocation4 + $0x10] sm:$0xff]
          %v701 = vld [vmem:[#allocation4 + $0x18] sm:$0xff]
          %703 = vset.pattern.permute.xlu0 0
          %704 = vperm.xlu0 %703, %v694
          %v705 = vpop.permute.xlu0 %704
          %708 = vset.pattern.permute.xlu0 0
          %709 = vperm.xlu0 %708, %v695
          %v710 = vpop.permute.xlu0 %709
          %713 = vset.pattern.permute.xlu0 0
          %714 = vperm.xlu0 %713, %v696
          %v715 = vpop.permute.xlu0 %714
          %718 = vset.pattern.permute.xlu0 0
          %719 = vperm.xlu0 %718, %v697
          %v720 = vpop.permute.xlu0 %719
          %v722 = vmul.f32 %v698, %v705
          %v723 = vmul.f32 %v699, %v710
          %v724 = vmul.f32 %v700, %v715
          %v725 = vmul.f32 %v701, %v720
          %v726 = vlaneseq
          %v727 = vshrl.u32 %v726, 7
          %v728 = vsub.s32 0, %v727
          %v729 = vrot.slane %v689, %v728
          %v730 = vadd.f32 %v722, %v729
          %v731 = vadd.f32 %v723, %v729
          %v732 = vadd.f32 %v724, %v729
          %v733 = vadd.f32 %v725, %v729
          %vm734 = vcmp.gt.f32.partialorder %v730, 0.0
          %vm735 = vcmp.gt.f32.partialorder %v731, 0.0
          %vm736 = vcmp.gt.f32.partialorder %v732, 0.0
          %vm737 = vcmp.gt.f32.partialorder %v733, 0.0
          %v738 = vmin.f32 %v730, 0.0
          %v739 = vmin.f32 %v731, 0.0
          %v740 = vmin.f32 %v732, 0.0
          %v741 = vmin.f32 %v733, 0.0
          %v742 = vmul.f32 %v738, 1.442695
          %v743 = vpow.pop %v742
          %v744 = vmul.f32 %v739, 1.442695
          %v745 = vpow.pop %v744
          %v746 = vmul.f32 %v740, 1.442695
          %v747 = vpow.pop %v746
          %v748 = vmul.f32 %v741, 1.442695
          %v749 = vpow.pop %v748
          %v750 = vsub.f32 %v743, 1.0
          %v751 = vsub.f32 %v745, 1.0
          %v752 = vsub.f32 %v747, 1.0
          %v753 = vsub.f32 %v749, 1.0
          %v754 = vsel %vm734, %v730, %v750
          %v755 = vsel %vm735, %v731, %v751
          %v756 = vsel %vm736, %v732, %v752
          %v757 = vsel %vm737, %v733, %v753
          %v758 = vpack.c.bf16 %v755, %v754
          %v759 = vpack.c.bf16 %v757, %v756
          %v760 = vld [vmem:[%s4] sm:$0xf]
          %v761 = vld [vmem:[%s4 + $0x4] sm:$0xf]
          %v762 = vld [vmem:[%s4 + $0x8] sm:$0xf]
          %v763 = vld [vmem:[%s4 + $0xc] sm:$0xf]
          %v764 = vld [vmem:[%s4 + $0x10] sm:$0xf]
          %v765 = vld [vmem:[%s4 + $0x14] sm:$0xf]
          %v766 = vld [vmem:[%s4 + $0x18] sm:$0xf]
          %v767 = vld [vmem:[%s4 + $0x1c] sm:$0xf]
          %v768 = vld [vmem:[%s4 + $0x20] sm:$0xf]
          %v769 = vld [vmem:[%s4 + $0x24] sm:$0xf]
          %v770 = vld [vmem:[%s4 + $0x28] sm:$0xf]
          %v771 = vld [vmem:[%s4 + $0x2c] sm:$0xf]
          %v772 = vld [vmem:[%s4 + $0x30] sm:$0xf]
          %v773 = vld [vmem:[%s4 + $0x34] sm:$0xf]
          %v774 = vld [vmem:[%s4 + $0x38] sm:$0xf]
          %v775 = vld [vmem:[%s4 + $0x3c] sm:$0xf]
          %v776 = vlaneseq
          %v777 = vshrl.u32 %v776, 7
          %v778 = vsub.s32 1, %v777
          %v779 = vrot.slane %v689, %v778
          %v796 = vunpack.c.l.b16 %v760
          %v797 = vunpack.c.l.b16 %v761
          %v798 = vunpack.c.l.b16 %v762
          %v799 = vunpack.c.l.b16 %v763
          %v800 = vunpack.c.l.b16 %v764
          %v801 = vunpack.c.l.b16 %v765
          %v802 = vunpack.c.l.b16 %v766
          %v803 = vunpack.c.l.b16 %v767
          %v804 = vunpack.c.l.b16 %v768
          %v805 = vunpack.c.l.b16 %v769
          %v806 = vunpack.c.l.b16 %v770
          %v807 = vunpack.c.l.b16 %v771
          %v808 = vunpack.c.l.b16 %v772
          %v809 = vunpack.c.l.b16 %v773
          %v810 = vunpack.c.l.b16 %v774
          %v811 = vunpack.c.l.b16 %v775
          %v812 = vpack.c.b16 %v797, %v796
          %v813 = vpack.c.b16 %v799, %v798
          %v814 = vpack.c.b16 %v801, %v800
          %v815 = vpack.c.b16 %v803, %v802
          %v816 = vpack.c.b16 %v805, %v804
          %v817 = vpack.c.b16 %v807, %v806
          %v818 = vpack.c.b16 %v809, %v808
          %v819 = vpack.c.b16 %v811, %v810
          %828 = vmatprep.subr.bf16.mxu0 0
          %829 = vmatpush1.bf16.msra.mxu0 %v812
          %830 = vmatprep.subr.bf16.mxu0 0
          %831 = vmatpush1.bf16.msra.mxu0 %v813
          %832 = vmatprep.subr.bf16.mxu0 0
          %833 = vmatpush1.bf16.msra.mxu0 %v814
          %834 = vmatprep.subr.bf16.mxu0 0
          %835 = vmatpush1.bf16.msra.mxu0 %v815
          %836 = vmatprep.subr.bf16.mxu0 0
          %837 = vmatpush1.bf16.msra.mxu0 %v816
          %838 = vmatprep.subr.bf16.mxu0 0
          %839 = vmatpush1.bf16.msra.mxu0 %v817
          %840 = vmatprep.subr.bf16.mxu0 0
          %841 = vmatpush1.bf16.msra.mxu0 %v818
          %842 = vmatprep.subr.bf16.mxu0 0
          %843 = vmatpush1.bf16.msra.mxu0 %v819
          %844 = vmatprep.subr.bf16.mxu0 0
          %845 = vmatpush1.bf16.msra.mxu0 0
          %846 = vmatprep.subr.bf16.mxu0 0
          %847 = vmatpush1.bf16.msra.mxu0 0
          %848 = vmatprep.subr.bf16.mxu0 0
          %849 = vmatpush1.bf16.msra.mxu0 0
          %850 = vmatprep.subr.bf16.mxu0 0
          %851 = vmatpush1.bf16.msra.mxu0 0
          %852 = vmatprep.subr.bf16.mxu0 0
          %853 = vmatpush1.bf16.msra.mxu0 0
          %854 = vmatprep.subr.bf16.mxu0 0
          %855 = vmatpush1.bf16.msra.mxu0 0
          %856 = vmatprep.subr.bf16.mxu0 0
          %857 = vmatpush1.bf16.msra.mxu0 0
          %858 = vmatprep.subr.bf16.mxu0 0
          %859 = vmatpush1.bf16.msra.mxu0 0
          %860 = vmatprep.mubr.bf16.mxu0 0
          %861 = vmatmul.mubr.bf16.gmra.mrb[0].mxu0 %v758
          %v862 = vpop.f32.mrb[0].mxu0
          %v863 = vadd.f32 %v779, %v862
          %v864 = vpop.f32.mrb[0].mxu0
          %v865 = vpop.f32.mrb[0].mxu0
          %v866 = vadd.f32 %v779, %v865
          %v867 = vpop.f32.mrb[0].mxu0
          %868 = vmatprep.mubr.bf16.mxu0 0
          %869 = vmatmul.mubr.bf16.gmra.mrb[0].mxu0 %v759
          %v870 = vpop.f32.mrb[0].mxu0
          %v871 = vadd.f32 %v779, %v870
          %v872 = vpop.f32.mrb[0].mxu0
          %v873 = vpop.f32.mrb[0].mxu0
          %v874 = vadd.f32 %v779, %v873
          %v875 = vpop.f32.mrb[0].mxu0
          %876 = vdwg.mxu0
          %v877 = vmax.f32 %v863, 0.0
          %v878 = vmax.f32 %v866, 0.0
          %v879 = vmax.f32 %v871, 0.0
          %v880 = vmax.f32 %v874, 0.0
          %v881 = vpack.c.bf16 %v878, %v877
          %v882 = vpack.c.bf16 %v880, %v879
          %s883 = scalar_lea.vmem %s4, 64
          %v884 = vld [vmem:[%s883] sm:$0xf]
          %v885 = vld [vmem:[%s883 + $0x4] sm:$0xf]
          %v886 = vld [vmem:[%s883 + $0x8] sm:$0xf]
          %v887 = vld [vmem:[%s883 + $0xc] sm:$0xf]
          %v888 = vld [vmem:[%s883 + $0x10] sm:$0xf]
          %v889 = vld [vmem:[%s883 + $0x14] sm:$0xf]
          %v890 = vld [vmem:[%s883 + $0x18] sm:$0xf]
          %v891 = vld [vmem:[%s883 + $0x1c] sm:$0xf]
          %v892 = vld [vmem:[%s883 + $0x20] sm:$0xf]
          %v893 = vld [vmem:[%s883 + $0x24] sm:$0xf]
          %v894 = vld [vmem:[%s883 + $0x28] sm:$0xf]
          %v895 = vld [vmem:[%s883 + $0x2c] sm:$0xf]
          %v896 = vld [vmem:[%s883 + $0x30] sm:$0xf]
          %v897 = vld [vmem:[%s883 + $0x34] sm:$0xf]
          %v898 = vld [vmem:[%s883 + $0x38] sm:$0xf]
          %v899 = vld [vmem:[%s883 + $0x3c] sm:$0xf]
          %v900 = vlaneseq
          %v901 = vshrl.u32 %v900, 7
          %v902 = vsub.s32 2, %v901
          %v903 = vrot.slane %v689, %v902
          %v920 = vunpack.c.l.b16 %v884
          %v921 = vunpack.c.l.b16 %v885
          %v922 = vunpack.c.l.b16 %v886
          %v923 = vunpack.c.l.b16 %v887
          %v924 = vunpack.c.l.b16 %v888
          %v925 = vunpack.c.l.b16 %v889
          %v926 = vunpack.c.l.b16 %v890
          %v927 = vunpack.c.l.b16 %v891
          %v928 = vunpack.c.l.b16 %v892
          %v929 = vunpack.c.l.b16 %v893
          %v930 = vunpack.c.l.b16 %v894
          %v931 = vunpack.c.l.b16 %v895
          %v932 = vunpack.c.l.b16 %v896
          %v933 = vunpack.c.l.b16 %v897
          %v934 = vunpack.c.l.b16 %v898
          %v935 = vunpack.c.l.b16 %v899
          %v936 = vpack.c.b16 %v921, %v920
          %v937 = vpack.c.b16 %v923, %v922
          %v938 = vpack.c.b16 %v925, %v924
          %v939 = vpack.c.b16 %v927, %v926
          %v940 = vpack.c.b16 %v929, %v928
          %v941 = vpack.c.b16 %v931, %v930
          %v942 = vpack.c.b16 %v933, %v932
          %v943 = vpack.c.b16 %v935, %v934
          %952 = vmatprep.subr.bf16.mxu0 0
          %953 = vmatpush1.bf16.msra.mxu0 %v936
          %954 = vmatprep.subr.bf16.mxu0 0
          %955 = vmatpush1.bf16.msra.mxu0 %v937
          %956 = vmatprep.subr.bf16.mxu0 0
          %957 = vmatpush1.bf16.msra.mxu0 %v938
          %958 = vmatprep.subr.bf16.mxu0 0
          %959 = vmatpush1.bf16.msra.mxu0 %v939
          %960 = vmatprep.subr.bf16.mxu0 0
          %961 = vmatpush1.bf16.msra.mxu0 %v940
          %962 = vmatprep.subr.bf16.mxu0 0
          %963 = vmatpush1.bf16.msra.mxu0 %v941
          %964 = vmatprep.subr.bf16.mxu0 0
          %965 = vmatpush1.bf16.msra.mxu0 %v942
          %966 = vmatprep.subr.bf16.mxu0 0
          %967 = vmatpush1.bf16.msra.mxu0 %v943
          %968 = vmatprep.subr.bf16.mxu0 0
          %969 = vmatpush1.bf16.msra.mxu0 0
          %970 = vmatprep.subr.bf16.mxu0 0
          %971 = vmatpush1.bf16.msra.mxu0 0
          %972 = vmatprep.subr.bf16.mxu0 0
          %973 = vmatpush1.bf16.msra.mxu0 0
          %974 = vmatprep.subr.bf16.mxu0 0
          %975 = vmatpush1.bf16.msra.mxu0 0
          %976 = vmatprep.subr.bf16.mxu0 0
          %977 = vmatpush1.bf16.msra.mxu0 0
          %978 = vmatprep.subr.bf16.mxu0 0
          %979 = vmatpush1.bf16.msra.mxu0 0
          %980 = vmatprep.subr.bf16.mxu0 0
          %981 = vmatpush1.bf16.msra.mxu0 0
          %982 = vmatprep.subr.bf16.mxu0 0
          %983 = vmatpush1.bf16.msra.mxu0 0
          %984 = vmatprep.mubr.bf16.mxu0 0
          %985 = vmatmul.mubr.bf16.gmra.mrb[0].mxu0 %v881
          %v986 = vpop.f32.mrb[0].mxu0
          %v987 = vadd.f32 %v903, %v986
          %v988 = vpop.f32.mrb[0].mxu0
          %v989 = vpop.f32.mrb[0].mxu0
          %v990 = vadd.f32 %v903, %v989
          %v991 = vpop.f32.mrb[0].mxu0
          %992 = vmatprep.mubr.bf16.mxu0 0
          %993 = vmatmul.mubr.bf16.gmra.mrb[0].mxu0 %v882
          %v994 = vpop.f32.mrb[0].mxu0
          %v995 = vadd.f32 %v903, %v994
          %v996 = vpop.f32.mrb[0].mxu0
          %v997 = vpop.f32.mrb[0].mxu0
          %v998 = vadd.f32 %v903, %v997
          %v999 = vpop.f32.mrb[0].mxu0
          %1000 = vdwg.mxu0
          %1001 = vst [vmem:[%s333] sm:$0xff] %v987
          %1002 = vst [vmem:[%s333 + $0x8] sm:$0xff] %v990
          %1003 = vst [vmem:[%s333 + $0x10] sm:$0xff] %v995
          %1004 = vst [vmem:[%s333 + $0x18] sm:$0xff] %v998
        $region60: #{tpu_custom_call.1} parent=43 // pred_fallthru
          _
        %s1005 = sand.u32 %s192, 1
        %s1006 = scalar_lea.sflag [#allocation7], %s1005
        %s1007 = sand.u32 %s192, 1
        %s1008 = smul.addr %s1007, 32
        %s1009 = scalar_lea.vmem [#allocation10], %s1008
        // Predicated region
        $region61: #{tpu_custom_call.1} parent=43 // pred_check
          %p1010 = pneg %p202
        $region62: #{tpu_custom_call.1} parent=43 // pred_check_branch
          %1012 = sbr.rel (%p1010) target = $region64
        $region63: #{tpu_custom_call.1} parent=43 // pred_region
          %s1013 = smul.u32 4, %s28
          %s1015 = ssub.s32 512, 512
          %1016 = vsyncadd %s1006, %s1015
          %s1017 = smul.addr %s1013, 128
          %s1018 = scalar_lea.hbm %s6, %s1017
          %s1019 = sshll.u32 %s1009, 4
          %s1020 = int_to_ptr.vmem [resolvable:$true] %s1019
          %1025 = dma.vmem_to_hbm [thread:$0]  %s1020, 512, %s1018, %s1006, 128, 128, 8
        $region64: #{tpu_custom_call.1} parent=43 // pred_fallthru
          _
      $region44: #{tpu_custom_call.1} parent=5 // pred_fallthru
        _
      %p1026 = scmp.le.s32.totalorder 2, %s19
      // Predicated region
      $region65: #{tpu_custom_call.1} parent=5 // pred_check
        %p1027 = pneg %p1026
      $region66: #{tpu_custom_call.1} parent=5 // pred_check_branch
        %1029 = sbr.rel (%p1027) target = $region68
      $region67: #{tpu_custom_call.1} parent=5 // pred_region
        %s1030 = ssub.s32 %s19, 2
        // Predicated region
        $region69: #{tpu_custom_call.1} parent=67 // pred_check
          %p1031 = pneg %p208
        $region70: #{tpu_custom_call.1} parent=67 // pred_check_branch
          %1033 = sbr.rel (%p1031) target = $region72
        $region71: #{tpu_custom_call.1} parent=67 // pred_region
          %s1034 = sand.u32 %s193, 1
          %s1035 = scalar_lea.sflag [#allocation7], %s1034
          %s1036 = sand.u32 %s193, 1
          %s1037 = smul.addr %s1036, 32
          %s1038 = scalar_lea.vmem [#allocation10], %s1037
          %1039 = dma.done %s1035, 512
        $region72: #{tpu_custom_call.1} parent=67 // pred_fallthru
          _
      $region68: #{tpu_custom_call.1} parent=5 // pred_fallthru
        _
    $region6: #{tpu_custom_call.1} parent=1 // loop_footer
      %s23 = sadd.s32 1, %s19
    $region7: #{tpu_custom_call.1} parent=1 // loop_footer_branch
      %18 = sbr.rel target = $region3
    $region8: #{tpu_custom_call.1} parent=1 // loop_exit
      _
    %1040 = vsyncpa [#allocation6], 1
    %s1041 = scalar_lea.sflag [#allocation6], 1
    %1042 = vsyncpa %s1041, 1
    %1043 = vsyncpa [#allocation9], 1
    %1044 = vsyncpa [#allocation7], 1
    %s1045 = scalar_lea.sflag [#allocation7], 1
    %1046 = vsyncpa %s1045, 1

</llo_original>
